<compile_context>
chip_gen: v5e
topology: v5e:2x2
jax: 0.10.0
libtpu: 0.0.40
codegen_flags: <defaults>
</compile_context>

<pallas_src>
import functools

import jax
import jax.numpy as jnp
from jax.experimental import pallas as pl
from jax.experimental.pallas import tpu as pltpu

_LANE = 128
# Conservative per-kernel VMEM budget so double-buffered in/out tiles fit
# v5e's 16 MiB default scoped VMEM (and trivially v6e 32 MiB / v7x).
_VMEM_BUDGET_BYTES = 12 * 1024 * 1024


def _batchnorm_kernel(x_ref, gamma_ref, beta_ref, o_ref, *, eps, inv_n):
    # x_ref:     (n_batch, TILE_D)   -- full batch, one lane-aligned slab
    # gamma_ref: (1, TILE_D) f32
    # beta_ref:  (1, TILE_D) f32
    x = x_ref[...].astype(jnp.float32)

    # Per-neuron statistics over the batch dimension (biased variance).
    # Two-pass (centered) form; tile is VMEM-resident so this is cheap.
    mean = jnp.sum(x, axis=0, keepdims=True) * inv_n             # (1, TILE_D)
    centered = x - mean
    var = jnp.sum(centered * centered, axis=0, keepdims=True) * inv_n

    inv_denom = jax.lax.rsqrt(var + eps)                         # EUP rsqrt

    # Fused affine: y = gamma * (x - mean) * inv_denom + beta = x*scale + shift
    scale = gamma_ref[...] * inv_denom                           # (1, TILE_D)
    shift = beta_ref[...] - mean * scale                         # (1, TILE_D)
    o_ref[...] = (x * scale + shift).astype(o_ref.dtype)


def _round_up(x, m):
    return ((x + m - 1) // m) * m


def custom_batch_norm(x, gamma, beta, eps=1e-05, tile_d=None):
    """Batch norm forward matching CustomBatchNormManualFunction.forward.

    Args:
      x:     (n_batch, n_neurons)
      gamma: (n_neurons,) per-neuron scale
      beta:  (n_neurons,) per-neuron shift
      eps:   small float added to the variance
    Returns:
      (n_batch, n_neurons) normalized, scaled, shifted tensor (dtype of x).
    """
    n_batch, n_neurons = x.shape
    out_dtype = x.dtype

    # --- Pick a lane-aligned column tile that fits the VMEM budget. --------
    if tile_d is None:
        in_item = jnp.dtype(x.dtype).itemsize
        out_item = jnp.dtype(out_dtype).itemsize
        # Input tile + output tile, each double-buffered by the pipeline.
        bytes_per_col = n_batch * (in_item + out_item) * 2
        max_cols = max(_LANE, _VMEM_BUDGET_BYTES // max(bytes_per_col, 1))
        tile_d = max(_LANE, (max_cols // _LANE) * _LANE)
    tile_d = min(tile_d, _round_up(n_neurons, _LANE))

    # --- Pad the neuron axis so the grid divides evenly and stores are full
    #     128-lane slabs.  Padded columns produce zeros and are sliced off. --
    d_pad = _round_up(n_neurons, tile_d)
    if d_pad != n_neurons:
        x = jnp.pad(x, ((0, 0), (0, d_pad - n_neurons)))
        gamma = jnp.pad(gamma, (0, d_pad - n_neurons))
        beta = jnp.pad(beta, (0, d_pad - n_neurons))

    gamma2d = gamma.reshape(1, d_pad).astype(jnp.float32)
    beta2d = beta.reshape(1, d_pad).astype(jnp.float32)

    kernel = functools.partial(
        _batchnorm_kernel, eps=float(eps), inv_n=float(1.0 / n_batch)
    )
    grid = (d_pad // tile_d,)

    out = pl.pallas_call(
        kernel,
        out_shape=jax.ShapeDtypeStruct((n_batch, d_pad), out_dtype),
        grid=grid,
        in_specs=[
            pl.BlockSpec((n_batch, tile_d), lambda j: (0, j)),
            pl.BlockSpec((1, tile_d), lambda j: (0, j)),
            pl.BlockSpec((1, tile_d), lambda j: (0, j)),
        ],
        out_specs=pl.BlockSpec((n_batch, tile_d), lambda j: (0, j)),
        compiler_params=pltpu.CompilerParams(
            dimension_semantics=("parallel",),
        ),
    )(x, gamma2d, beta2d)

    if d_pad != n_neurons:
        out = out[:, :n_neurons]
    return out


class CustomBatchNormManual:
    """JAX/Pallas analogue of CustomBatchNormManualModule (forward only)."""
    # TODO(synk): custom backward pass (autograd.Function.backward) not
    # implemented; this mirrors the forward computation only.

    def __init__(self, n_neurons, eps=1e-05):
        self.n_neurons = n_neurons
        self.eps = eps
        # Matches nn.Parameter(torch.ones(n_neurons)) / torch.zeros(n_neurons).
        self.gamma = jnp.ones((n_neurons,), dtype=jnp.float32)
        self.beta = jnp.zeros((n_neurons,), dtype=jnp.float32)

    def __call__(self, x):
        if x.shape[1] != self.n_neurons:
            raise Exception(
                "Input size is not correct. Input is {}, while it was "
                "initalized with {}".format(x.shape[1], self.n_neurons)
            )
        return custom_batch_norm(x, self.gamma, self.beta, self.eps)


if __name__ == "__main__":
    key = jax.random.PRNGKey(0)
    n_batch, n_neurons = 8, 32
    x = jax.random.normal(key, (n_batch, n_neurons), dtype=jnp.float32)

    module = CustomBatchNormManual(n_neurons)
    out = module(x)
    out = jax.block_until_ready(out)

    # Reference check in plain JAX (same math as the PyTorch forward).
    mean = jnp.mean(x, axis=0)
    var = jnp.mean((x - mean) ** 2, axis=0)
    ref = module.gamma * (x - mean) / jnp.sqrt(var + module.eps) + module.beta
    assert out.shape == (n_batch, n_neurons)
    assert jnp.allclose(out, ref, atol=1e-5, rtol=1e-5)

    print("KERNEL_OK")
</pallas_src>

<mosaic_0001>
module attributes {stable_mosaic.version = 11 : i64} {
  func.func @_batchnorm_kernel(%arg0: i32, %arg1: memref<8x128xf32, #tpu.memory_space<vmem>>, %arg2: memref<1x128xf32, #tpu.memory_space<vmem>>, %arg3: memref<1x128xf32, #tpu.memory_space<vmem>>, %arg4: memref<8x128xf32, #tpu.memory_space<vmem>>) attributes {dimension_semantics = [#tpu.dimension_semantics<parallel>], iteration_bounds = array<i64: 1>, scalar_prefetch = 0 : i64, scratch_operands = 0 : i64, tpu.core_type = #tpu.core_type<tc>, window_params = [{transform_indices = @transform_0, window_bounds = array<i64: 8, 128>}, {transform_indices = @transform_1, window_bounds = array<i64: 1, 128>}, {transform_indices = @transform_2, window_bounds = array<i64: 1, 128>}, {transform_indices = @transform_3, window_bounds = array<i64: 8, 128>}]} {
    %c0 = arith.constant 0 : index
    %c0_0 = arith.constant 0 : index
    %0 = vector.load %arg1[%c0, %c0_0] : memref<8x128xf32, #tpu.memory_space<vmem>>, vector<8x128xf32>
    %cst = arith.constant dense<0.000000e+00> : vector<128xf32>
    %1 = vector.multi_reduction <add>, %0, %cst [0] : vector<8x128xf32> to vector<128xf32>
    %2 = vector.shape_cast %1 : vector<128xf32> to vector<1x128xf32>
    %cst_1 = arith.constant 1.250000e-01 : f32
    %3 = vector.broadcast %cst_1 : f32 to vector<1x128xf32>
    %4 = arith.mulf %2, %3 : vector<1x128xf32>
    %5 = vector.broadcast %4 : vector<1x128xf32> to vector<8x128xf32>
    %6 = arith.subf %0, %5 : vector<8x128xf32>
    %7 = arith.mulf %6, %6 : vector<8x128xf32>
    %cst_2 = arith.constant dense<0.000000e+00> : vector<128xf32>
    %8 = vector.multi_reduction <add>, %7, %cst_2 [0] : vector<8x128xf32> to vector<128xf32>
    %9 = vector.shape_cast %8 : vector<128xf32> to vector<1x128xf32>
    %cst_3 = arith.constant 1.250000e-01 : f32
    %10 = vector.broadcast %cst_3 : f32 to vector<1x128xf32>
    %11 = arith.mulf %9, %10 : vector<1x128xf32>
    %cst_4 = arith.constant 9.99999974E-6 : f32
    %12 = vector.broadcast %cst_4 : f32 to vector<1x128xf32>
    %13 = arith.addf %11, %12 : vector<1x128xf32>
    %14 = math.rsqrt %13 : vector<1x128xf32>
    %c0_5 = arith.constant 0 : index
    %c0_6 = arith.constant 0 : index
    %15 = vector.load %arg2[%c0_5, %c0_6] : memref<1x128xf32, #tpu.memory_space<vmem>>, vector<1x128xf32>
    %16 = arith.mulf %15, %14 : vector<1x128xf32>
    %c0_7 = arith.constant 0 : index
    %c0_8 = arith.constant 0 : index
    %17 = vector.load %arg3[%c0_7, %c0_8] : memref<1x128xf32, #tpu.memory_space<vmem>>, vector<1x128xf32>
    %18 = arith.mulf %4, %16 : vector<1x128xf32>
    %19 = arith.subf %17, %18 : vector<1x128xf32>
    %20 = vector.broadcast %16 : vector<1x128xf32> to vector<8x128xf32>
    %21 = arith.mulf %0, %20 : vector<8x128xf32>
    %22 = vector.broadcast %19 : vector<1x128xf32> to vector<8x128xf32>
    %23 = arith.addf %21, %22 : vector<8x128xf32>
    %c0_9 = arith.constant 0 : index
    %c0_10 = arith.constant 0 : index
    %24 = vector.load %arg4[%c0_9, %c0_10] : memref<8x128xf32, #tpu.memory_space<vmem>>, vector<8x128xf32>
    tpu.vector_store %arg4[%c0_9, %c0_10], %23 {strides = array<i32>} : memref<8x128xf32, #tpu.memory_space<vmem>>, vector<8x128xf32>,
    return
  }
  func.func @transform_0(%arg0: i32) -> (i32, i32) {
    %c0_i32 = arith.constant 0 : i32
    %c0_i32_0 = arith.constant 0 : i32
    return %c0_i32, %arg0 : i32, i32
  }
  func.func @transform_1(%arg0: i32) -> (i32, i32) {
    %c0_i32 = arith.constant 0 : i32
    %c0_i32_0 = arith.constant 0 : i32
    return %c0_i32, %arg0 : i32, i32
  }
  func.func @transform_2(%arg0: i32) -> (i32, i32) {
    %c0_i32 = arith.constant 0 : i32
    %c0_i32_0 = arith.constant 0 : i32
    return %c0_i32, %arg0 : i32, i32
  }
  func.func @transform_3(%arg0: i32) -> (i32, i32) {
    %c0_i32 = arith.constant 0 : i32
    %c0_i32_0 = arith.constant 0 : i32
    return %c0_i32, %arg0 : i32, i32
  }
}

</mosaic_0001>

<llo_original>
// kernel: tpu_custom_call.1
$region0: #{tpu_custom_call.1}
  #allocation0 [shape = 'u32[]', space=smem, size = 0x4, offset = 0x4, fixed_abs, tag = 'smem constant byte address 0x4 - core index']
  #allocation1 [shape = 'u32[72,128]{1,0:T(1,128)}', space=vmem, size = 0x9000, scoped, tag = 'internal scratch']
  %s0 = inlined_call_operand.hbm [shape: f32[8,128], index: 0, kind: input, shape index: {}]
  %s1 = inlined_call_operand.hbm [shape: f32[1,128], index: 1, kind: input, shape index: {}]
  %s2 = inlined_call_operand.vmem [shape: f32[1,128], index: 2, kind: input, shape index: {}]
  %s3 = inlined_call_operand.hbm [shape: f32[8,128], index: 3, kind: output, shape index: {}]
  %s4 = sld [smem:[#allocation0]]
  $region30: #{tpu_custom_call.1} parent=0
    _
  %s6 = ssub.s32 1, %s4
  %s7 = scalar_select 0, %s6, %s4
  $region1: #{tpu_custom_call.1} parent=0
    #allocation2 [shape = 'u8[4096]{0}', space=vmem, size = 0x1000, scoped, tag = 'input window, operand 0, single buffered']
    #allocation3 [shape = 's32[1]{0}', space=sflag, size = 0x4, scoped, tag = 'scoped memory for tpu_custom_call.1']
    #allocation4 [shape = 's32[1]{0}', space=sflag, size = 0x4, scoped, tag = 'scoped memory for tpu_custom_call.1']
    #allocation5 [shape = 'u8[512]{0}', space=vmem, size = 0x400, scoped, tag = 'input window, operand 1, single buffered']
    #allocation6 [shape = 's32[1]{0}', space=sflag, size = 0x4, scoped, tag = 'scoped memory for tpu_custom_call.1']
    #allocation7 [shape = 'u8[4096]{0}', space=vmem, size = 0x1000, scoped, tag = 'output window, operand 0, single buffered']
    %8 = vsyncpa [#allocation3], 0
    %9 = vsyncpa [#allocation6], 0
    %10 = vsyncpa [#allocation4], 0
    // Predicated region
    $region2: #{tpu_custom_call.1} parent=1 // pred_check
      _
    $region3: #{tpu_custom_call.1} parent=1 // pred_check_branch
      %12 = sbr.rel (0) target = $region5
    $region4: #{tpu_custom_call.1} parent=1 // pred_region
      %14 = vsyncadd [#allocation3], 0
      %s16 = sshll.u32 %s0, 4
      %s17 = int_to_ptr.hbm [resolvable:$true] %s16
      %s18 = sshll.u32 [#allocation2], 4
      %s19 = int_to_ptr.vmem [resolvable:$true] %s18
      %21 = dma.hbm_to_vmem [thread:$0]  %s17, 128, %s19, [#allocation3]
    $region5: #{tpu_custom_call.1} parent=1 // pred_fallthru
      _
    // Predicated region
    $region6: #{tpu_custom_call.1} parent=1 // pred_check
      _
    $region7: #{tpu_custom_call.1} parent=1 // pred_check_branch
      %23 = sbr.rel (0) target = $region9
    $region8: #{tpu_custom_call.1} parent=1 // pred_region
      %25 = vsyncadd [#allocation6], 0
      %s27 = sshll.u32 %s1, 4
      %s28 = int_to_ptr.hbm [resolvable:$true] %s27
      %s29 = sshll.u32 [#allocation5], 4
      %s30 = int_to_ptr.vmem [resolvable:$true] %s29
      %32 = dma.hbm_to_vmem [thread:$0]  %s28, 16, %s30, [#allocation6]
    $region9: #{tpu_custom_call.1} parent=1 // pred_fallthru
      _
    // Predicated region
    $region10: #{tpu_custom_call.1} parent=1 // pred_check
      _
    $region11: #{tpu_custom_call.1} parent=1 // pred_check_branch
      %34 = sbr.rel (0) target = $region13
    $region12: #{tpu_custom_call.1} parent=1 // pred_region
      _
    $region13: #{tpu_custom_call.1} parent=1 // pred_fallthru
      _
    // Predicated region
    $region14: #{tpu_custom_call.1} parent=1 // pred_check
      _
    $region15: #{tpu_custom_call.1} parent=1 // pred_check_branch
      %36 = sbr.rel (0) target = $region17
    $region16: #{tpu_custom_call.1} parent=1 // pred_region
      %38 = dma.done [#allocation3], 128
    $region17: #{tpu_custom_call.1} parent=1 // pred_fallthru
      _
    // Predicated region
    $region18: #{tpu_custom_call.1} parent=1 // pred_check
      _
    $region19: #{tpu_custom_call.1} parent=1 // pred_check_branch
      %40 = sbr.rel (0) target = $region21
    $region20: #{tpu_custom_call.1} parent=1 // pred_region
      %42 = dma.done [#allocation6], 16
    $region21: #{tpu_custom_call.1} parent=1 // pred_fallthru
      _
    %v43 = vld [vmem:[#allocation2] sm:$0xff]
    %v44 = vrot.slane %v43, 4
    %v45 = vadd.f32 %v43, %v44
    %v46 = vrot.slane %v45, 2
    %v47 = vadd.f32 %v45, %v46
    %v48 = vrot.slane %v47, 1
    %v49 = vadd.f32 %v47, %v48
    %v50 = vmul.f32 %v49, 0.125
    %v51 = vsub.f32 %v43, %v50
    %v52 = vmul.f32 %v51, %v51
    %v53 = vrot.slane %v52, 4
    %v54 = vadd.f32 %v52, %v53
    %v55 = vrot.slane %v54, 2
    %v56 = vadd.f32 %v54, %v55
    %v57 = vrot.slane %v56, 1
    %v58 = vadd.f32 %v56, %v57
    %v59 = vmul.f32 %v58, 0.125
    %v60 = vadd.f32 %v59, 1e-05
    %v61 = vrsqrt.pop %v60
    %v62 = vmul.f32 %v61, %v60
    %v63 = vmul.f32 %v62, %v61
    %v64 = vmul.f32 0.5, %v63
    %v65 = vsub.f32 1.5, %v64
    %v66 = vmul.f32 %v61, %v65
    %vm67 = vweird.f32 %v60
    %vm68 = vweird.f32 %v61
    %vm69 = vmor %vm67, %vm68
    %v70 = vsel %vm69, %v61, %v66
    %v71 = vld [vmem:[#allocation5] sm:$0x1]
    %v72 = vmul.f32 %v71, %v70
    %v73 = vld [vmem:[%s2] sm:$0x1]
    %v74 = vmul.f32 %v50, %v72
    %v75 = vsub.f32 %v73, %v74
    %v77 = vperm.slane %v72, 0
    %v79 = vmul.f32 %v43, %v77
    %v81 = vperm.slane %v75, 0
    %v83 = vadd.f32 %v79, %v81
    %84 = vst [vmem:[#allocation7] sm:$0xff] %v83
    // Predicated region
    $region22: #{tpu_custom_call.1} parent=1 // pred_check
      _
    $region23: #{tpu_custom_call.1} parent=1 // pred_check_branch
      %86 = sbr.rel (0) target = $region25
    $region24: #{tpu_custom_call.1} parent=1 // pred_region
      %88 = vsyncadd [#allocation4], 0
      %s90 = sshll.u32 [#allocation7], 4
      %s91 = int_to_ptr.vmem [resolvable:$true] %s90
      %s92 = sshll.u32 %s3, 4
      %s93 = int_to_ptr.hbm [resolvable:$true] %s92
      %95 = dma.vmem_to_hbm [thread:$0]  %s91, 128, %s93, [#allocation4]
    $region25: #{tpu_custom_call.1} parent=1 // pred_fallthru
      _
    // Predicated region
    $region26: #{tpu_custom_call.1} parent=1 // pred_check
      _
    $region27: #{tpu_custom_call.1} parent=1 // pred_check_branch
      %97 = sbr.rel (0) target = $region29
    $region28: #{tpu_custom_call.1} parent=1 // pred_region
      %99 = dma.done [#allocation4], 128
    $region29: #{tpu_custom_call.1} parent=1 // pred_fallthru
      _
    %100 = vsyncpa [#allocation3], 1
    %101 = vsyncpa [#allocation6], 1
    %102 = vsyncpa [#allocation4], 1

</llo_original>
